<compile_context>
chip_gen: v5e
topology: v5e:2x2
jax: 0.10.0
libtpu: 0.0.40
codegen_flags: <defaults>
</compile_context>

<pallas_src>
import functools

import jax
import jax.numpy as jnp
from jax.experimental import pallas as pl
from jax.experimental.pallas import tpu as pltpu


def _transformer_kernel(z_ref, qp_ref, pp_ref, o_ref, *, n_layer, n_head,
                        n_ctx, dp1, activation, leaky_alpha):
    """One block of batch elements: all layers / heads of extended attention.

    z_ref : (Bt, N+1, d+1)                  tokens for this batch block
    qp_ref: (n_layer, d+1, n_head*(d+1))    Q_full, heads packed along lanes
    pp_ref: (n_layer, d+1, n_head*(d+1))    P_full^T, heads packed along lanes
    o_ref : (Bt, N+1, d+1)                  output tokens
    """
    _, np1, _ = z_ref.shape
    z = z_ref[...].astype(jnp.float32)

    # A = eye(N+1) with A[N, N] = 0  ==>  zero the test-token row of `key`.
    row_ids = jax.lax.broadcasted_iota(jnp.int32, (1, np1, 1), 1)
    keep_row = (row_ids < n_ctx).astype(jnp.float32)        # (1, N+1, 1)

    inv_n = 1.0 / float(n_ctx)

    def layer_step(layer, z):
        zb = z.astype(jnp.bfloat16)          # bf16 MXU operands, f32 accum
        qp = qp_ref[layer]                    # (d+1, H*(d+1)) bf16
        pp = pp_ref[layer]                    # (d+1, H*(d+1)) bf16

        # All heads at once (heads packed along the lane axis):
        #   zq_all[..., h*(d+1)+j]  = (Z Q_h)[..., j]
        #   key_all[..., h*(d+1)+i] = (Z P_h^T)[..., i]
        zq_all = jax.lax.dot_general(
            zb, qp, (((2,), (0,)), ((), ())),
            preferred_element_type=jnp.float32)
        key_all = jax.lax.dot_general(
            zb, pp, (((2,), (0,)), ((), ())),
            preferred_element_type=jnp.float32)
        key_all = (key_all * keep_row).astype(jnp.bfloat16)  # apply A

        residues = jnp.zeros_like(z)
        for h in range(n_head):
            sl = slice(h * dp1, (h + 1) * dp1)
            zq_h = zq_all[:, :, sl].astype(jnp.bfloat16)
            # attn[b,n,m] = sum_i zq_h[b,n,i] * Z[b,m,i]  (transpose folded in)
            attn = jax.lax.dot_general(
                zq_h, zb, (((2,), (2,)), ((0,), (0,))),
                preferred_element_type=jnp.float32)

            if activation == "relu":
                attn = jnp.maximum(attn, 0.0)
            elif activation == "leakyrelu":
                attn = jnp.where(attn >= 0.0, attn, leaky_alpha * attn)
            elif activation == "softmax":
                m = jnp.max(attn, axis=-1, keepdims=True)
                e = jnp.exp(attn - m)
                s = jnp.sum(e, axis=-1, keepdims=True)
                attn = e * pl.reciprocal(s, approx=True)
            # activation is None -> linear

            out_h = jax.lax.dot_general(
                attn.astype(jnp.bfloat16), key_all[:, :, sl],
                (((2,), (1,)), ((0,), (0,))),
                preferred_element_type=jnp.float32)
            residues = residues + out_h
        return z + residues * inv_n

    if n_layer <= 4:
        for layer in range(n_layer):
            z = layer_step(layer, z)
    else:
        # Bounds vreg live ranges for deep stacks (Python unroll would not).
        z = jax.lax.fori_loop(0, n_layer, layer_step, z)

    o_ref[...] = z.astype(o_ref.dtype)


def _pick_block_b(B, cap=8):
    """Largest divisor of B that keeps >=2 grid steps (v7x: 2 TensorCores)."""
    upper = min(cap, max(1, B // 2))
    bb = upper
    while bb > 1 and B % bb:
        bb -= 1
    return max(bb, 1)


def transformer_forward(Z, allparam, *, activation=None, leaky_alpha=0.5,
                        block_b=None):
    """Forward pass matching Transformer.forward.

    Z:        (B, N+1, d+1) float32 tokens.
    allparam: (n_layer, n_head, 2, d, d) float32 parameters.
    """
    B, np1, dp1 = Z.shape
    n_layer, n_head, _, d, _ = allparam.shape
    assert dp1 == d + 1
    n_ctx = np1 - 1

    # Plain-JAX glue: extend P, Q to (d+1, d+1); P gets a 1 at [d, d].
    P = allparam[:, :, 0]                         # (L, H, d, d)
    Q = allparam[:, :, 1]                         # (L, H, d, d)
    pad = ((0, 0), (0, 0), (0, 1), (0, 1))
    P_full = jnp.pad(P, pad).at[:, :, d, d].set(1.0)   # (L, H, d+1, d+1)
    Q_full = jnp.pad(Q, pad)

    # Pack heads along the lane axis (bf16 MXU operands):
    #   Q_packed [l, i, h*(d+1)+j] = Q_full[l, h, i, j]
    #   PT_packed[l, j, h*(d+1)+i] = P_full[l, h, i, j]   (i.e. P_full^T packed)
    Q_packed = jnp.transpose(Q_full, (0, 2, 1, 3)).reshape(
        n_layer, dp1, n_head * dp1).astype(jnp.bfloat16)
    PT_packed = jnp.transpose(P_full, (0, 3, 1, 2)).reshape(
        n_layer, dp1, n_head * dp1).astype(jnp.bfloat16)

    if block_b is None:
        block_b = _pick_block_b(B)
    assert B % block_b == 0, "batch must be divisible by the batch block"

    kernel = functools.partial(
        _transformer_kernel,
        n_layer=n_layer, n_head=n_head, n_ctx=n_ctx, dp1=dp1,
        activation=activation, leaky_alpha=leaky_alpha,
    )

    # TODO(synk): for very large N or n_layer (v7x 64 MiB VMEM), add per-layer
    # P/Q blocking and flash-style tiling of the (N+1)^2 attention matrix.
    return pl.pallas_call(
        kernel,
        out_shape=jax.ShapeDtypeStruct((B, np1, dp1), Z.dtype),
        grid_spec=pltpu.PrefetchScalarGridSpec(
            num_scalar_prefetch=0,
            grid=(B // block_b,),
            in_specs=[
                pl.BlockSpec((block_b, np1, dp1), lambda b: (b, 0, 0)),
                pl.BlockSpec((n_layer, dp1, n_head * dp1),
                             lambda b: (0, 0, 0)),
                pl.BlockSpec((n_layer, dp1, n_head * dp1),
                             lambda b: (0, 0, 0)),
            ],
            out_specs=pl.BlockSpec((block_b, np1, dp1), lambda b: (b, 0, 0)),
        ),
        compiler_params=pltpu.CompilerParams(
            dimension_semantics=("parallel",),
        ),
    )(Z, Q_packed, PT_packed)


def _reference_forward(Z, allparam, *, activation=None, leaky_alpha=0.5):
    """Pure-JAX reference mirroring the PyTorch module (for verification)."""
    B, np1, dp1 = Z.shape
    n_layer, n_head, _, d, _ = allparam.shape
    N = np1 - 1
    A = jnp.eye(np1).at[N, N].set(0.0)
    for l in range(n_layer):
        Z_prev = Z
        residues = 0.0
        for h in range(n_head):
            P = allparam[l, h, 0]
            Q = allparam[l, h, 1]
            P_full = jnp.pad(P, ((0, 1), (0, 1))).at[d, d].set(1.0)
            Q_full = jnp.pad(Q, ((0, 1), (0, 1)))
            attn = jnp.einsum("BNi,ij,BMj->BNM", Z_prev, Q_full, Z_prev)
            if activation == "relu":
                attn = jnp.maximum(attn, 0.0)
            elif activation == "leakyrelu":
                attn = jnp.where(attn >= 0.0, attn, leaky_alpha * attn)
            elif activation == "softmax":
                attn = jax.nn.softmax(attn, axis=2)
            key = jnp.einsum("ij,BNj->BNi", P_full, Z_prev)
            out = jnp.einsum("BNM,ML,BLi->BNi", attn, A, key)
            residues = residues + out / N
        Z = Z_prev + residues
    return Z


if __name__ == "__main__":
    # Small, deterministic problem: B=4, N=8 context tokens (+1 test), d=4.
    n_layer, n_head, d, var = 2, 2, 4, 0.1
    B, N = 4, 8

    key = jax.random.PRNGKey(0)
    k_param, k_z = jax.random.split(key)

    # allparam ~ Normal(0, var)  (matches torch normal_(0, var))
    allparam = (var * jax.random.normal(
        k_param, (n_layer, n_head, 2, d, d))).astype(jnp.float32)

    # Tokens (B, N+1, d+1); zero out the label slot of the test token.
    Z = jax.random.normal(k_z, (B, N + 1, d + 1)).astype(jnp.float32)
    Z = Z.at[:, N, d].set(0.0)

    # bf16 MXU inputs (f32 accumulation) -> slightly looser tolerance.
    for act in (None, "relu", "leakyrelu", "softmax"):
        out = jax.block_until_ready(
            transformer_forward(Z, allparam, activation=act))
        ref = _reference_forward(Z, allparam, activation=act)
        assert out.shape == (B, N + 1, d + 1)
        assert jnp.allclose(out, ref, atol=5e-2, rtol=5e-2), \
            f"mismatch vs reference for activation={act}"

    print("KERNEL_OK")
</pallas_src>

<mosaic_0001>
module attributes {stable_mosaic.version = 11 : i64} {
  func.func @_transformer_kernel(%arg0: i32, %arg1: memref<2x9x5xf32, #tpu.memory_space<vmem>>, %arg2: memref<2x5x10xbf16, #tpu.memory_space<vmem>>, %arg3: memref<2x5x10xbf16, #tpu.memory_space<vmem>>, %arg4: memref<2x9x5xf32, #tpu.memory_space<vmem>>) attributes {dimension_semantics = [#tpu.dimension_semantics<parallel>], iteration_bounds = array<i64: 2>, scalar_prefetch = 0 : i64, scratch_operands = 0 : i64, tpu.core_type = #tpu.core_type<tc>, window_params = [{transform_indices = @transform_0, window_bounds = array<i64: 2, 9, 5>}, {pipeline_mode = #tpu.pipeline_mode<synchronous>, transform_indices = @transform_1, window_bounds = array<i64: 2, 5, 10>}, {pipeline_mode = #tpu.pipeline_mode<synchronous>, transform_indices = @transform_2, window_bounds = array<i64: 2, 5, 10>}, {transform_indices = @transform_3, window_bounds = array<i64: 2, 9, 5>}]} {
    %c0 = arith.constant 0 : index
    %c0_0 = arith.constant 0 : index
    %c0_1 = arith.constant 0 : index
    %0 = vector.load %arg1[%c0, %c0_0, %c0_1] : memref<2x9x5xf32, #tpu.memory_space<vmem>>, vector<2x9x5xf32>
    %1 = tpu.iota {dimensions = array<i32: 1>} : vector<1x9x1xi32>
    %c8_i32 = arith.constant 8 : i32
    %2 = vector.broadcast %c8_i32 : i32 to vector<1x9x1xi32>
    %3 = arith.cmpi slt, %1, %2 : vector<1x9x1xi32>
    %4 = arith.extui %3 : vector<1x9x1xi1> to vector<1x9x1xi32>
    %5 = arith.sitofp %4 : vector<1x9x1xi32> to vector<1x9x1xf32>
    %6 = arith.truncf %0 : vector<2x9x5xf32> to vector<2x9x5xbf16>
    %c0_2 = arith.constant 0 : index
    %c0_3 = arith.constant 0 : index
    %c0_4 = arith.constant 0 : index
    %7 = vector.load %arg2[%c0_2, %c0_3, %c0_4] : memref<2x5x10xbf16, #tpu.memory_space<vmem>>, vector<1x5x10xbf16>
    %8 = vector.shape_cast %7 : vector<1x5x10xbf16> to vector<5x10xbf16>
    %c0_5 = arith.constant 0 : index
    %c0_6 = arith.constant 0 : index
    %c0_7 = arith.constant 0 : index
    %9 = vector.load %arg3[%c0_5, %c0_6, %c0_7] : memref<2x5x10xbf16, #tpu.memory_space<vmem>>, vector<1x5x10xbf16>
    %10 = vector.shape_cast %9 : vector<1x5x10xbf16> to vector<5x10xbf16>
    %cst = arith.constant dense<0.000000e+00> : vector<2x9x10xf32>
    %11 = tpu.matmul %6, %8, %cst {dimension_numbers = #tpu.dot_dimension_numbers<[2], [0], [0, 1], [1], [0, 0, 0, 1, 1, 1], [], []>} : vector<2x9x5xbf16>, vector<5x10xbf16>, vector<2x9x10xf32> -> vector<2x9x10xf32>
    %cst_8 = arith.constant dense<0.000000e+00> : vector<2x9x10xf32>
    %12 = tpu.matmul %6, %10, %cst_8 {dimension_numbers = #tpu.dot_dimension_numbers<[2], [0], [0, 1], [1], [0, 0, 0, 1, 1, 1], [], []>} : vector<2x9x5xbf16>, vector<5x10xbf16>, vector<2x9x10xf32> -> vector<2x9x10xf32>
    %13 = vector.broadcast %5 : vector<1x9x1xf32> to vector<2x9x10xf32>
    %14 = arith.mulf %12, %13 : vector<2x9x10xf32>
    %15 = arith.truncf %14 : vector<2x9x10xf32> to vector<2x9x10xbf16>
    %cst_9 = arith.constant 0.000000e+00 : f32
    %16 = vector.broadcast %cst_9 : f32 to vector<2x9x5xf32>
    %17 = vector.extract_strided_slice %11 {offsets = [0, 0, 0], sizes = [2, 9, 5], strides = [1, 1, 1]} : vector<2x9x10xf32> to vector<2x9x5xf32>
    %18 = arith.truncf %17 : vector<2x9x5xf32> to vector<2x9x5xbf16>
    %cst_10 = arith.constant dense<0.000000e+00> : vector<2x9x9xf32>
    %19 = tpu.matmul %18, %6, %cst_10 {dimension_numbers = #tpu.dot_dimension_numbers<[2], [2], [1], [1], [0, 0, 0, 1, 1, 1], [0], [0]>} : vector<2x9x5xbf16>, vector<2x9x5xbf16>, vector<2x9x9xf32> -> vector<2x9x9xf32>
    %20 = arith.truncf %19 : vector<2x9x9xf32> to vector<2x9x9xbf16>
    %21 = vector.extract_strided_slice %15 {offsets = [0, 0, 0], sizes = [2, 9, 5], strides = [1, 1, 1]} : vector<2x9x10xbf16> to vector<2x9x5xbf16>
    %cst_11 = arith.constant dense<0.000000e+00> : vector<2x9x5xf32>
    %22 = tpu.matmul %20, %21, %cst_11 {dimension_numbers = #tpu.dot_dimension_numbers<[2], [1], [1], [2], [0, 0, 0, 1, 1, 2], [0], [0]>} : vector<2x9x9xbf16>, vector<2x9x5xbf16>, vector<2x9x5xf32> -> vector<2x9x5xf32>
    %23 = arith.addf %16, %22 : vector<2x9x5xf32>
    %24 = vector.extract_strided_slice %11 {offsets = [0, 0, 5], sizes = [2, 9, 5], strides = [1, 1, 1]} : vector<2x9x10xf32> to vector<2x9x5xf32>
    %25 = arith.truncf %24 : vector<2x9x5xf32> to vector<2x9x5xbf16>
    %cst_12 = arith.constant dense<0.000000e+00> : vector<2x9x9xf32>
    %26 = tpu.matmul %25, %6, %cst_12 {dimension_numbers = #tpu.dot_dimension_numbers<[2], [2], [1], [1], [0, 0, 0, 1, 1, 1], [0], [0]>} : vector<2x9x5xbf16>, vector<2x9x5xbf16>, vector<2x9x9xf32> -> vector<2x9x9xf32>
    %27 = arith.truncf %26 : vector<2x9x9xf32> to vector<2x9x9xbf16>
    %28 = vector.extract_strided_slice %15 {offsets = [0, 0, 5], sizes = [2, 9, 5], strides = [1, 1, 1]} : vector<2x9x10xbf16> to vector<2x9x5xbf16>
    %cst_13 = arith.constant dense<0.000000e+00> : vector<2x9x5xf32>
    %29 = tpu.matmul %27, %28, %cst_13 {dimension_numbers = #tpu.dot_dimension_numbers<[2], [1], [1], [2], [0, 0, 0, 1, 1, 2], [0], [0]>} : vector<2x9x9xbf16>, vector<2x9x5xbf16>, vector<2x9x5xf32> -> vector<2x9x5xf32>
    %30 = arith.addf %23, %29 : vector<2x9x5xf32>
    %cst_14 = arith.constant 1.250000e-01 : f32
    %31 = vector.broadcast %cst_14 : f32 to vector<2x9x5xf32>
    %32 = arith.mulf %30, %31 : vector<2x9x5xf32>
    %33 = arith.addf %0, %32 : vector<2x9x5xf32>
    %34 = arith.truncf %33 : vector<2x9x5xf32> to vector<2x9x5xbf16>
    %c1 = arith.constant 1 : index
    %c0_15 = arith.constant 0 : index
    %c0_16 = arith.constant 0 : index
    %35 = vector.load %arg2[%c1, %c0_15, %c0_16] : memref<2x5x10xbf16, #tpu.memory_space<vmem>>, vector<1x5x10xbf16>
    %36 = vector.shape_cast %35 : vector<1x5x10xbf16> to vector<5x10xbf16>
    %c1_17 = arith.constant 1 : index
    %c0_18 = arith.constant 0 : index
    %c0_19 = arith.constant 0 : index
    %37 = vector.load %arg3[%c1_17, %c0_18, %c0_19] : memref<2x5x10xbf16, #tpu.memory_space<vmem>>, vector<1x5x10xbf16>
    %38 = vector.shape_cast %37 : vector<1x5x10xbf16> to vector<5x10xbf16>
    %cst_20 = arith.constant dense<0.000000e+00> : vector<2x9x10xf32>
    %39 = tpu.matmul %34, %36, %cst_20 {dimension_numbers = #tpu.dot_dimension_numbers<[2], [0], [0, 1], [1], [0, 0, 0, 1, 1, 1], [], []>} : vector<2x9x5xbf16>, vector<5x10xbf16>, vector<2x9x10xf32> -> vector<2x9x10xf32>
    %cst_21 = arith.constant dense<0.000000e+00> : vector<2x9x10xf32>
    %40 = tpu.matmul %34, %38, %cst_21 {dimension_numbers = #tpu.dot_dimension_numbers<[2], [0], [0, 1], [1], [0, 0, 0, 1, 1, 1], [], []>} : vector<2x9x5xbf16>, vector<5x10xbf16>, vector<2x9x10xf32> -> vector<2x9x10xf32>
    %41 = vector.broadcast %5 : vector<1x9x1xf32> to vector<2x9x10xf32>
    %42 = arith.mulf %40, %41 : vector<2x9x10xf32>
    %43 = arith.truncf %42 : vector<2x9x10xf32> to vector<2x9x10xbf16>
    %cst_22 = arith.constant 0.000000e+00 : f32
    %44 = vector.broadcast %cst_22 : f32 to vector<2x9x5xf32>
    %45 = vector.extract_strided_slice %39 {offsets = [0, 0, 0], sizes = [2, 9, 5], strides = [1, 1, 1]} : vector<2x9x10xf32> to vector<2x9x5xf32>
    %46 = arith.truncf %45 : vector<2x9x5xf32> to vector<2x9x5xbf16>
    %cst_23 = arith.constant dense<0.000000e+00> : vector<2x9x9xf32>
    %47 = tpu.matmul %46, %34, %cst_23 {dimension_numbers = #tpu.dot_dimension_numbers<[2], [2], [1], [1], [0, 0, 0, 1, 1, 1], [0], [0]>} : vector<2x9x5xbf16>, vector<2x9x5xbf16>, vector<2x9x9xf32> -> vector<2x9x9xf32>
    %48 = arith.truncf %47 : vector<2x9x9xf32> to vector<2x9x9xbf16>
    %49 = vector.extract_strided_slice %43 {offsets = [0, 0, 0], sizes = [2, 9, 5], strides = [1, 1, 1]} : vector<2x9x10xbf16> to vector<2x9x5xbf16>
    %cst_24 = arith.constant dense<0.000000e+00> : vector<2x9x5xf32>
    %50 = tpu.matmul %48, %49, %cst_24 {dimension_numbers = #tpu.dot_dimension_numbers<[2], [1], [1], [2], [0, 0, 0, 1, 1, 2], [0], [0]>} : vector<2x9x9xbf16>, vector<2x9x5xbf16>, vector<2x9x5xf32> -> vector<2x9x5xf32>
    %51 = arith.addf %44, %50 : vector<2x9x5xf32>
    %52 = vector.extract_strided_slice %39 {offsets = [0, 0, 5], sizes = [2, 9, 5], strides = [1, 1, 1]} : vector<2x9x10xf32> to vector<2x9x5xf32>
    %53 = arith.truncf %52 : vector<2x9x5xf32> to vector<2x9x5xbf16>
    %cst_25 = arith.constant dense<0.000000e+00> : vector<2x9x9xf32>
    %54 = tpu.matmul %53, %34, %cst_25 {dimension_numbers = #tpu.dot_dimension_numbers<[2], [2], [1], [1], [0, 0, 0, 1, 1, 1], [0], [0]>} : vector<2x9x5xbf16>, vector<2x9x5xbf16>, vector<2x9x9xf32> -> vector<2x9x9xf32>
    %55 = arith.truncf %54 : vector<2x9x9xf32> to vector<2x9x9xbf16>
    %56 = vector.extract_strided_slice %43 {offsets = [0, 0, 5], sizes = [2, 9, 5], strides = [1, 1, 1]} : vector<2x9x10xbf16> to vector<2x9x5xbf16>
    %cst_26 = arith.constant dense<0.000000e+00> : vector<2x9x5xf32>
    %57 = tpu.matmul %55, %56, %cst_26 {dimension_numbers = #tpu.dot_dimension_numbers<[2], [1], [1], [2], [0, 0, 0, 1, 1, 2], [0], [0]>} : vector<2x9x9xbf16>, vector<2x9x5xbf16>, vector<2x9x5xf32> -> vector<2x9x5xf32>
    %58 = arith.addf %51, %57 : vector<2x9x5xf32>
    %cst_27 = arith.constant 1.250000e-01 : f32
    %59 = vector.broadcast %cst_27 : f32 to vector<2x9x5xf32>
    %60 = arith.mulf %58, %59 : vector<2x9x5xf32>
    %61 = arith.addf %33, %60 : vector<2x9x5xf32>
    %c0_28 = arith.constant 0 : index
    %c0_29 = arith.constant 0 : index
    %c0_30 = arith.constant 0 : index
    %62 = vector.load %arg4[%c0_28, %c0_29, %c0_30] : memref<2x9x5xf32, #tpu.memory_space<vmem>>, vector<2x9x5xf32>
    tpu.vector_store %arg4[%c0_28, %c0_29, %c0_30], %61 {strides = array<i32>} : memref<2x9x5xf32, #tpu.memory_space<vmem>>, vector<2x9x5xf32>,
    return
  }
  func.func @transform_0(%arg0: i32) -> (i32, i32, i32) {
    %c0_i32 = arith.constant 0 : i32
    %c0_i32_0 = arith.constant 0 : i32
    %c0_i32_1 = arith.constant 0 : i32
    return %arg0, %c0_i32, %c0_i32_0 : i32, i32, i32
  }
  func.func @transform_1(%arg0: i32) -> (i32, i32, i32) {
    %c0_i32 = arith.constant 0 : i32
    %c0_i32_0 = arith.constant 0 : i32
    %c0_i32_1 = arith.constant 0 : i32
    %c0_i32_2 = arith.constant 0 : i32
    return %c0_i32, %c0_i32_0, %c0_i32_1 : i32, i32, i32
  }
  func.func @transform_2(%arg0: i32) -> (i32, i32, i32) {
    %c0_i32 = arith.constant 0 : i32
    %c0_i32_0 = arith.constant 0 : i32
    %c0_i32_1 = arith.constant 0 : i32
    %c0_i32_2 = arith.constant 0 : i32
    return %c0_i32, %c0_i32_0, %c0_i32_1 : i32, i32, i32
  }
  func.func @transform_3(%arg0: i32) -> (i32, i32, i32) {
    %c0_i32 = arith.constant 0 : i32
    %c0_i32_0 = arith.constant 0 : i32
    %c0_i32_1 = arith.constant 0 : i32
    return %arg0, %c0_i32, %c0_i32_0 : i32, i32, i32
  }
}

</mosaic_0001>

<llo_original>
// kernel: tpu_custom_call.1
$region0: #{tpu_custom_call.1}
  #allocation0 [shape = 'u32[]', space=smem, size = 0x4, offset = 0x4, fixed_abs, tag = 'smem constant byte address 0x4 - core index']
  #allocation1 [shape = 'u32[72,128]{1,0:T(1,128)}', space=vmem, size = 0x9000, scoped, tag = 'internal scratch']
  %s0 = inlined_call_operand.vmem [shape: f32[4,9,5], index: 0, kind: input, shape index: {}]
  %s1 = inlined_call_operand.vmem [shape: bf16[2,5,10], index: 1, kind: input, shape index: {}]
  %s2 = inlined_call_operand.vmem [shape: bf16[2,5,10], index: 2, kind: input, shape index: {}]
  %s3 = inlined_call_operand.vmem [shape: f32[4,9,5], index: 3, kind: output, shape index: {}]
  %s4 = sld [smem:[#allocation0]]
  $region45: #{tpu_custom_call.1} parent=0
    _
  %s6 = ssub.s32 1, %s4
  %s7 = scalar_select 0, %s6, %s4
  loop: start=0, step=1, limit=4
  $region2: #{tpu_custom_call.1} parent=0 // loop_pre_header
    _
  $region3: #{tpu_custom_call.1} parent=0 // loop_header
    %s9 = sphi 0, %s13
    %p10 = scmp.ge.s32.totalorder %s9, 4
    %s19 = sphi 0, %s21
    %s22 = sphi 0, %s19
    %s23 = sphi 0, %s22
    %s39 = sphi 0, %s23
    %s43 = sphi 0, %s43
    %s45 = sphi 0, %s43
    %s46 = sphi 0, %s45
    %s60 = sphi 0, %s46
    %s64 = sphi 0, %s64
    %s66 = sphi 0, %s64
    %s67 = sphi 0, %s66
    %s81 = sphi 0, %s67
    %s87 = sphi 0, %s89
    %s90 = sphi 0, %s87
    %s91 = sphi 0, %s90
    %s107 = sphi 0, %s91
  $region4: #{tpu_custom_call.1} parent=0 // loop_header_branch
    %12 = sbr.rel (%p10) target = $region8
  $region5: #{tpu_custom_call.1} parent=0 // loop_body
    %s14 = ssub.s32 %s9, 1
    %s15 = ssub.s32 %s9, 2
    %s16 = sadd.s32 %s9, 1
    %s17 = ssub.s32 %s9, %s16
    %p18 = scmp.eq.s32.totalorder %s17, 0
    %s20 = sadd.s32 %s19, 1
    %s21 = scalar_select %p18, %s19, %s20
    %p24 = pneg %p18
    %p25 = scmp.eq.s32.totalorder %s9, 1
    %p26 = por %p24, %p25
    %p27 = scmp.ne.s32.totalorder %s19, %s22
    %p28 = scmp.eq.s32.totalorder %s9, 0
    %p29 = por %p27, %p28
    %p30 = scmp.ne.s32.totalorder %s19, %s22
    %p31 = scmp.eq.s32.totalorder %s14, 1
    %p32 = por %p30, %p31
    %p33 = scmp.ne.s32.totalorder %s22, %s23
    %p34 = scmp.eq.s32.totalorder %s14, 0
    %p35 = por %p33, %p34
    %p36 = scmp.ne.s32.totalorder %s22, %s23
    %p37 = scmp.eq.s32.totalorder %s15, 1
    %p38 = por %p36, %p37
    %p40 = scmp.ne.s32.totalorder %s23, %s39
    %p41 = scmp.eq.s32.totalorder %s15, 0
    %p42 = por %p40, %p41
    %s44 = sadd.s32 %s43, 1
    %p47 = scmp.eq.s32.totalorder %s9, 1
    %p48 = scmp.ne.s32.totalorder %s43, %s45
    %p49 = scmp.eq.s32.totalorder %s9, 0
    %p50 = por %p48, %p49
    %p51 = scmp.ne.s32.totalorder %s43, %s45
    %p52 = scmp.eq.s32.totalorder %s14, 1
    %p53 = por %p51, %p52
    %p54 = scmp.ne.s32.totalorder %s45, %s46
    %p55 = scmp.eq.s32.totalorder %s14, 0
    %p56 = por %p54, %p55
    %p57 = scmp.ne.s32.totalorder %s45, %s46
    %p58 = scmp.eq.s32.totalorder %s15, 1
    %p59 = por %p57, %p58
    %p61 = scmp.ne.s32.totalorder %s46, %s60
    %p62 = scmp.eq.s32.totalorder %s15, 0
    %p63 = por %p61, %p62
    %s65 = sadd.s32 %s64, 1
    %p68 = scmp.eq.s32.totalorder %s9, 1
    %p69 = scmp.ne.s32.totalorder %s64, %s66
    %p70 = scmp.eq.s32.totalorder %s9, 0
    %p71 = por %p69, %p70
    %p72 = scmp.ne.s32.totalorder %s64, %s66
    %p73 = scmp.eq.s32.totalorder %s14, 1
    %p74 = por %p72, %p73
    %p75 = scmp.ne.s32.totalorder %s66, %s67
    %p76 = scmp.eq.s32.totalorder %s14, 0
    %p77 = por %p75, %p76
    %p78 = scmp.ne.s32.totalorder %s66, %s67
    %p79 = scmp.eq.s32.totalorder %s15, 1
    %p80 = por %p78, %p79
    %p82 = scmp.ne.s32.totalorder %s67, %s81
    %p83 = scmp.eq.s32.totalorder %s15, 0
    %p84 = por %p82, %p83
    %s85 = ssub.s32 %s9, %s16
    %p86 = scmp.eq.s32.totalorder %s85, 0
    %s88 = sadd.s32 %s87, 1
    %s89 = scalar_select %p86, %s87, %s88
    %p92 = pneg %p86
    %p93 = scmp.eq.s32.totalorder %s9, 1
    %p94 = por %p92, %p93
    %p95 = scmp.ne.s32.totalorder %s87, %s90
    %p96 = scmp.eq.s32.totalorder %s9, 0
    %p97 = por %p95, %p96
    %p98 = scmp.ne.s32.totalorder %s87, %s90
    %p99 = scmp.eq.s32.totalorder %s14, 1
    %p100 = por %p98, %p99
    %p101 = scmp.ne.s32.totalorder %s90, %s91
    %p102 = scmp.eq.s32.totalorder %s14, 0
    %p103 = por %p101, %p102
    %p104 = scmp.ne.s32.totalorder %s90, %s91
    %p105 = scmp.eq.s32.totalorder %s15, 1
    %p106 = por %p104, %p105
    %p108 = scmp.ne.s32.totalorder %s91, %s107
    %p109 = scmp.eq.s32.totalorder %s15, 0
    %p110 = por %p108, %p109
    %p111 = scmp.le.s32.totalorder 1, %s9
    %p112 = scmp.lt.s32.totalorder %s9, 3
    %p113 = pnand %p111, %p112
    %p114 = pneg %p113
    // Predicated region
    $region9: #{tpu_custom_call.1} parent=5 // pred_check
      _
    $region10: #{tpu_custom_call.1} parent=5 // pred_check_branch
      %116 = sbr.rel (%p113) target = $region12
    $region11: #{tpu_custom_call.1} parent=5 // pred_region
      %s117 = ssub.s32 %s9, 1
      // Predicated region
      $region13: #{tpu_custom_call.1} parent=11 // pred_check
        %p118 = pneg %p56
      $region14: #{tpu_custom_call.1} parent=11 // pred_check_branch
        %120 = sbr.rel (%p118) target = $region16
      $region15: #{tpu_custom_call.1} parent=11 // pred_region
        _
      $region16: #{tpu_custom_call.1} parent=11 // pred_fallthru
        _
      // Predicated region
      $region17: #{tpu_custom_call.1} parent=11 // pred_check
        %p121 = pneg %p77
      $region18: #{tpu_custom_call.1} parent=11 // pred_check_branch
        %123 = sbr.rel (%p121) target = $region20
      $region19: #{tpu_custom_call.1} parent=11 // pred_region
        _
      $region20: #{tpu_custom_call.1} parent=11 // pred_fallthru
        _
    $region12: #{tpu_custom_call.1} parent=5 // pred_fallthru
      _
    %p124 = scmp.lt.s32.totalorder %s9, 2
    // Predicated region
    $region21: #{tpu_custom_call.1} parent=5 // pred_check
      %p125 = pneg %p124
    $region22: #{tpu_custom_call.1} parent=5 // pred_check_branch
      %127 = sbr.rel (%p125) target = $region24
    $region23: #{tpu_custom_call.1} parent=5 // pred_region
      // Predicated region
      $region25: #{tpu_custom_call.1} parent=23 // pred_check
        %p128 = pneg %p29
      $region26: #{tpu_custom_call.1} parent=23 // pred_check_branch
        %130 = sbr.rel (%p128) target = $region28
      $region27: #{tpu_custom_call.1} parent=23 // pred_region
        %s131 = smul.u32 2, %s9
        %p132 = scmp.lt.s32.totalorder %s131, 3
        %s133 = scalar_select %p132, %s131, 3
        %s134 = smul.addr %s133, 2
        %s135 = smul.addr %s134, 8
        %s136 = scalar_lea.vmem %s0, %s135
        %s137 = smul.u32 2, %s9
      $region28: #{tpu_custom_call.1} parent=23 // pred_fallthru
        _
    $region24: #{tpu_custom_call.1} parent=5 // pred_fallthru
      _
    %p138 = scmp.le.s32.totalorder 1, %s9
    %p139 = scmp.lt.s32.totalorder %s9, 3
    %p140 = pnand %p138, %p139
    %p141 = pneg %p140
    // Predicated region
    $region29: #{tpu_custom_call.1} parent=5 // pred_check
      _
    $region30: #{tpu_custom_call.1} parent=5 // pred_check_branch
      %143 = sbr.rel (%p140) target = $region32
    $region31: #{tpu_custom_call.1} parent=5 // pred_region
      %s144 = ssub.s32 %s9, 1
      %s145 = smul.u32 2, %s14
      %p146 = scmp.lt.s32.totalorder %s145, 3
      %s147 = scalar_select %p146, %s145, 3
      %s148 = smul.addr %s147, 2
      %s149 = smul.addr %s148, 8
      %s150 = scalar_lea.vmem %s0, %s149
      %p151 = pneg %p35
      %p152 = pneg %p32
      %p153 = pneg %p56
      %p154 = pneg %p53
      %p155 = pneg %p77
      %p156 = pneg %p74
      %p157 = pneg %p103
      %p158 = pneg %p100
      %s159 = smul.u32 2, %s14
      %p160 = scmp.lt.s32.totalorder %s159, 3
      %s161 = scalar_select %p160, %s159, 3
      %s162 = smul.addr %s161, 2
      %s163 = smul.addr %s162, 8
      %s164 = scalar_lea.vmem %s3, %s163
      %s165 = smul.u32 2, %s14
      %p166 = scmp.lt.s32.totalorder %s165, 3
      %s167 = scalar_select %p166, %s165, 3
      %s168 = smul.addr %s167, 2
      %s169 = smul.addr %s168, 8
      %s170 = scalar_lea.vmem %s0, %s169
      %s171 = smul.u32 2, %s14
      %s172 = smul.u32 2, %s14
      %p173 = scmp.lt.s32.totalorder %s172, 3
      %s174 = scalar_select %p173, %s172, 3
      %s175 = smul.addr %s174, 2
      %s176 = smul.addr %s175, 8
      %s177 = scalar_lea.vmem %s3, %s176
      %s178 = smul.u32 2, %s14
      %v180 = vld [vmem:[%s170] sm:$0xff]
      %v181 = vld [vmem:[%s170 + $0x8] sm:$0x1]
      %v182 = vld [vmem:[%s170 + $0x10] sm:$0xff]
      %v183 = vld [vmem:[%s170 + $0x18] sm:$0x1]
      %v184 = vlaneseq
      %v185 = vshrl.u32 %v184, 7
      %v186 = vadd.s32 %v185, 8
      %vm187 = vcmp.lt.s32.totalorder %v185, 8
      %vm188 = vcmp.lt.s32.totalorder %v186, 8
      %v189 = vsel %vm187, 1, 0
      %v190 = vsel %vm188, 1, 0
      %v191 = vcvt.s32.f32 %v189
      %v192 = vcvt.s32.f32 %v190
      %v193 = vpack.c.bf16 %v180, %v180
      %v194 = vpack.c.bf16 %v181, %v181
      %v195 = vpack.c.bf16 %v182, %v182
      %v196 = vpack.c.bf16 %v183, %v183
      %v197 = vld [vmem:[%s1] sm:$0x7]
      %v198 = vld [vmem:[%s2] sm:$0x7]
      %v203 = vrot.slane %v193, 3
      %v204 = vrot.slane %v194, 3
      %v205 = vrot.slane %v195, 3
      %v206 = vrot.slane %v196, 3
      %vm207 = vcmask 1040384
      %v210 = vsel %vm207, %v193, %v203
      %vm212 = vcmask 1041409
      %v213 = vsel %vm212, %v193, %v203
      %v215 = vrot.slane %v213, 1
      %vm216 = vcmask 1042434
      %v217 = vsel %vm216, %v193, %v203
      %v219 = vrot.slane %v217, 2
      %vm220 = vcmask 1043459
      %v221 = vsel %vm220, %v193, %v203
      %v223 = vrot.slane %v221, 3
      %v226 = vsel %vm207, %v194, %v204
      %v230 = vsel %vm207, %v195, %v205
      %v232 = vsel %vm212, %v195, %v205
      %v234 = vrot.slane %v232, 1
      %v235 = vsel %vm216, %v195, %v205
      %v237 = vrot.slane %v235, 2
      %v238 = vsel %vm220, %v195, %v205
      %v240 = vrot.slane %v238, 3
      %v243 = vsel %vm207, %v196, %v206
      %v245 = vunpack.i.l.s16 %v210
      %v246 = vunpack.i.h.s16 %v210
      %v247 = vunpack.i.l.s16 %v215
      %v248 = vunpack.i.h.s16 %v215
      %v249 = vunpack.i.l.s16 %v219
      %v250 = vunpack.i.h.s16 %v219
      %v251 = vunpack.i.l.s16 %v223
      %v252 = vunpack.i.h.s16 %v223
      %v253 = vunpack.i.l.s16 %v226
      %v254 = vunpack.i.l.s16 %v230
      %v255 = vunpack.i.h.s16 %v230
      %v256 = vunpack.i.l.s16 %v234
      %v257 = vunpack.i.h.s16 %v234
      %v258 = vunpack.i.l.s16 %v237
      %v259 = vunpack.i.h.s16 %v237
      %v260 = vunpack.i.l.s16 %v240
      %v261 = vunpack.i.h.s16 %v240
      %v262 = vunpack.i.l.s16 %v243
      %v263 = vpack.i.b16 %v246, %v245
      %v264 = vpack.i.b16 %v248, %v247
      %v265 = vpack.i.b16 %v250, %v249
      %v266 = vpack.i.b16 %v252, %v251
      %v267 = vpack.i.b16 %v254, %v253
      %v268 = vpack.i.b16 %v256, %v255
      %v269 = vpack.i.b16 %v258, %v257
      %v270 = vpack.i.b16 %v260, %v259
      %v271 = vpack.i.b16 %v262, %v261
      %273 = vst [vmem:[#allocation1] ss:$9 sm:$0xff] %v263
      %s275 = scalar_lea.vmem [#allocation1], 1
      %276 = vst [vmem:[%s275] ss:$9 sm:$0xff] %v264
      %s278 = scalar_lea.vmem [#allocation1], 2
      %279 = vst [vmem:[%s278] ss:$9 sm:$0xff] %v265
      %s281 = scalar_lea.vmem [#allocation1], 3
      %282 = vst [vmem:[%s281] ss:$9 sm:$0xff] %v266
      %s284 = scalar_lea.vmem [#allocation1], 4
      %285 = vst [vmem:[%s284] ss:$9 sm:$0xff] %v267
      %s287 = scalar_lea.vmem [#allocation1], 5
      %288 = vst [vmem:[%s287] ss:$9 sm:$0xff] %v268
      %s290 = scalar_lea.vmem [#allocation1], 6
      %291 = vst [vmem:[%s290] ss:$9 sm:$0xff] %v269
      %s293 = scalar_lea.vmem [#allocation1], 7
      %294 = vst [vmem:[%s293] ss:$9 sm:$0xff] %v270
      %v295 = vld [vmem:[#allocation1] sm:$0xff]
      %297 = vst [vmem:[#allocation1] ss:$9 sm:$0xff] %v271
      %v298 = vld [vmem:[#allocation1] sm:$0xff]
      %vm299 = vcmask 39936
      %v300 = vsel %vm299, %v295, 0
      %v302 = vsel %vm299, %v298, 0
      %vm304 = vcmask 1041408
      %vm305 = vcmask 1042432
      %v306 = vsel %vm304, 4294967295, 65535
      %v307 = vsel %vm305, %v306, 0
      %v309 = vand.u32 %v197, %v307
      %311 = vmatpush.bf16.msra.mxu0 0
      %312 = vmatpush.bf16.msra.mxu0 0
      %313 = vmatpush.bf16.msra.mxu0 0
      %314 = vmatpush.bf16.msra.mxu0 0
      %315 = vmatpush.bf16.msra.mxu0 0
      %316 = vmatpush.bf16.msra.mxu0 0
      %317 = vmatpush.bf16.msra.mxu0 0
      %318 = vmatpush.bf16.msra.mxu0 %v309
      %319 = vmatmul.bf16.gmra.mxu0 %v300
      %v320 = vpop.f32.mrf.mxu0
      %v321 = vadd.f32 0.0, %v320
      %v322 = vpop.f32.mrf.mxu0
      %v323 = vadd.f32 0.0, %v322
      %324 = vmatmul.bf16.gmra.mxu0 %v302
      %v325 = vpop.f32.mrf.mxu0
      %v326 = vadd.f32 0.0, %v325
      %v327 = vpop.f32.mrf.mxu0
      %328 = vdwg.mxu0
      %v332 = vrot.slane %v321, 1
      %v333 = vrot.slane %v321, 2
      %v334 = vrot.slane %v321, 3
      %v335 = vrot.slane %v321, 4
      %v336 = vrot.slane %v321, 5
      %v337 = vrot.slane %v321, 6
      %v338 = vrot.slane %v321, 7
      %v339 = vrot.slane %v323, 1
      %v340 = vrot.slane %v323, 2
      %v341 = vrot.slane %v323, 3
      %v342 = vrot.slane %v323, 4
      %v343 = vrot.slane %v323, 5
      %v344 = vrot.slane %v323, 6
      %v345 = vrot.slane %v323, 7
      %v346 = vrot.slane %v326, 1
      %347 = vst [vmem:[#allocation1] ss:$9 sm:$0xff] %v263
      %s348 = scalar_lea.vmem [#allocation1], 1
      %349 = vst [vmem:[%s348] ss:$9 sm:$0xff] %v264
      %s350 = scalar_lea.vmem [#allocation1], 2
      %351 = vst [vmem:[%s350] ss:$9 sm:$0xff] %v265
      %s352 = scalar_lea.vmem [#allocation1], 3
      %353 = vst [vmem:[%s352] ss:$9 sm:$0xff] %v266
      %s354 = scalar_lea.vmem [#allocation1], 4
      %355 = vst [vmem:[%s354] ss:$9 sm:$0xff] %v267
      %s356 = scalar_lea.vmem [#allocation1], 5
      %357 = vst [vmem:[%s356] ss:$9 sm:$0xff] %v268
      %s358 = scalar_lea.vmem [#allocation1], 6
      %359 = vst [vmem:[%s358] ss:$9 sm:$0xff] %v269
      %s360 = scalar_lea.vmem [#allocation1], 7
      %361 = vst [vmem:[%s360] ss:$9 sm:$0xff] %v270
      %v362 = vld [vmem:[#allocation1] sm:$0xff]
      %363 = vst [vmem:[#allocation1] ss:$9 sm:$0xff] %v271
      %v364 = vld [vmem:[#allocation1] sm:$0xff]
      %v365 = vsel %vm299, %v362, 0
      %v367 = vsel %vm299, %v364, 0
      %v370 = vand.u32 %v198, %v307
      %372 = vmatpush.bf16.msra.mxu0 0
      %373 = vmatpush.bf16.msra.mxu0 0
      %374 = vmatpush.bf16.msra.mxu0 0
      %375 = vmatpush.bf16.msra.mxu0 0
      %376 = vmatpush.bf16.msra.mxu0 0
      %377 = vmatpush.bf16.msra.mxu0 0
      %378 = vmatpush.bf16.msra.mxu0 0
      %379 = vmatpush.bf16.msra.mxu0 %v370
      %380 = vmatmul.bf16.gmra.mxu0 %v365
      %v381 = vpop.f32.mrf.mxu0
      %v382 = vadd.f32 0.0, %v381
      %v383 = vpop.f32.mrf.mxu0
      %v384 = vadd.f32 0.0, %v383
      %385 = vmatmul.bf16.gmra.mxu0 %v367
      %v386 = vpop.f32.mrf.mxu0
      %v387 = vadd.f32 0.0, %v386
      %v388 = vpop.f32.mrf.mxu0
      %389 = vdwg.mxu0
      %v393 = vrot.slane %v382, 1
      %v394 = vrot.slane %v382, 2
      %v395 = vrot.slane %v382, 3
      %v396 = vrot.slane %v382, 4
      %v397 = vrot.slane %v382, 5
      %v398 = vrot.slane %v382, 6
      %v399 = vrot.slane %v382, 7
      %v400 = vrot.slane %v384, 1
      %v401 = vrot.slane %v384, 2
      %v402 = vrot.slane %v384, 3
      %v403 = vrot.slane %v384, 4
      %v404 = vrot.slane %v384, 5
      %v405 = vrot.slane %v384, 6
      %v406 = vrot.slane %v384, 7
      %v407 = vrot.slane %v387, 1
      %v425 = vperm.slane %v191, 0
      %v426 = vperm.slane %v191, 1
      %v427 = vperm.slane %v191, 2
      %v428 = vperm.slane %v191, 3
      %v429 = vperm.slane %v191, 4
      %v430 = vperm.slane %v191, 5
      %v431 = vperm.slane %v191, 6
      %v432 = vperm.slane %v191, 7
      %v433 = vperm.slane %v192, 0
      %v443 = vmul.f32 %v382, %v425
      %v444 = vmul.f32 %v393, %v426
      %v445 = vmul.f32 %v394, %v427
      %v446 = vmul.f32 %v395, %v428
      %v447 = vmul.f32 %v396, %v429
      %v448 = vmul.f32 %v397, %v430
      %v449 = vmul.f32 %v398, %v431
      %v450 = vmul.f32 %v399, %v432
      %v451 = vmul.f32 %v384, %v433
      %v452 = vmul.f32 %v400, %v425
      %v453 = vmul.f32 %v401, %v426
      %v454 = vmul.f32 %v402, %v427
      %v455 = vmul.f32 %v403, %v428
      %v456 = vmul.f32 %v404, %v429
      %v457 = vmul.f32 %v405, %v430
      %v458 = vmul.f32 %v406, %v431
      %v459 = vmul.f32 %v387, %v432
      %v460 = vmul.f32 %v407, %v433
      %479 = vst [vmem:[#allocation1] ss:$9 sm:$0xff] %v443
      %s480 = scalar_lea.vmem [#allocation1], 1
      %481 = vst [vmem:[%s480] ss:$9 sm:$0xff] %v444
      %s482 = scalar_lea.vmem [#allocation1], 2
      %483 = vst [vmem:[%s482] ss:$9 sm:$0xff] %v445
      %s484 = scalar_lea.vmem [#allocation1], 3
      %485 = vst [vmem:[%s484] ss:$9 sm:$0xff] %v446
      %s486 = scalar_lea.vmem [#allocation1], 4
      %487 = vst [vmem:[%s486] ss:$9 sm:$0xff] %v447
      %s488 = scalar_lea.vmem [#allocation1], 5
      %489 = vst [vmem:[%s488] ss:$9 sm:$0xff] %v448
      %s490 = scalar_lea.vmem [#allocation1], 6
      %491 = vst [vmem:[%s490] ss:$9 sm:$0xff] %v449
      %s492 = scalar_lea.vmem [#allocation1], 7
      %493 = vst [vmem:[%s492] ss:$9 sm:$0xff] %v450
      %v494 = vld [vmem:[#allocation1] sm:$0xff]
      %495 = vst [vmem:[#allocation1] ss:$9 sm:$0xff] %v451
      %v496 = vld [vmem:[#allocation1] sm:$0xff]
      %497 = vst [vmem:[#allocation1] ss:$9 sm:$0xff] %v452
      %498 = vst [vmem:[%s480] ss:$9 sm:$0xff] %v453
      %499 = vst [vmem:[%s482] ss:$9 sm:$0xff] %v454
      %500 = vst [vmem:[%s484] ss:$9 sm:$0xff] %v455
      %501 = vst [vmem:[%s486] ss:$9 sm:$0xff] %v456
      %502 = vst [vmem:[%s488] ss:$9 sm:$0xff] %v457
      %503 = vst [vmem:[%s490] ss:$9 sm:$0xff] %v458
      %504 = vst [vmem:[%s492] ss:$9 sm:$0xff] %v459
      %v505 = vld [vmem:[#allocation1] sm:$0xff]
      %506 = vst [vmem:[#allocation1] ss:$9 sm:$0xff] %v460
      %v507 = vld [vmem:[#allocation1] sm:$0xff]
      %v512 = vpack.c.bf16 %v494, %v494
      %v513 = vpack.c.bf16 %v496, %v496
      %v514 = vpack.c.bf16 %v505, %v505
      %v515 = vpack.c.bf16 %v507, %v507
      %516 = vst [vmem:[#allocation1] ss:$9 sm:$0xff] %v321
      %s517 = scalar_lea.vmem [#allocation1], 1
      %518 = vst [vmem:[%s517] ss:$9 sm:$0xff] %v332
      %s519 = scalar_lea.vmem [#allocation1], 2
      %520 = vst [vmem:[%s519] ss:$9 sm:$0xff] %v333
      %s521 = scalar_lea.vmem [#allocation1], 3
      %522 = vst [vmem:[%s521] ss:$9 sm:$0xff] %v334
      %s523 = scalar_lea.vmem [#allocation1], 4
      %524 = vst [vmem:[%s523] ss:$9 sm:$0xff] %v335
      %s525 = scalar_lea.vmem [#allocation1], 5
      %526 = vst [vmem:[%s525] ss:$9 sm:$0xff] %v336
      %s527 = scalar_lea.vmem [#allocation1], 6
      %528 = vst [vmem:[%s527] ss:$9 sm:$0xff] %v337
      %s529 = scalar_lea.vmem [#allocation1], 7
      %530 = vst [vmem:[%s529] ss:$9 sm:$0xff] %v338
      %v531 = vld [vmem:[#allocation1] sm:$0xff]
      %532 = vst [vmem:[#allocation1] ss:$9 sm:$0xff] %v323
      %v533 = vld [vmem:[#allocation1] sm:$0xff]
      %534 = vst [vmem:[#allocation1] ss:$9 sm:$0xff] %v339
      %535 = vst [vmem:[%s517] ss:$9 sm:$0xff] %v340
      %536 = vst [vmem:[%s519] ss:$9 sm:$0xff] %v341
      %537 = vst [vmem:[%s521] ss:$9 sm:$0xff] %v342
      %538 = vst [vmem:[%s523] ss:$9 sm:$0xff] %v343
      %539 = vst [vmem:[%s525] ss:$9 sm:$0xff] %v344
      %540 = vst [vmem:[%s527] ss:$9 sm:$0xff] %v345
      %541 = vst [vmem:[%s529] ss:$9 sm:$0xff] %v326
      %v542 = vld [vmem:[#allocation1] sm:$0xff]
      %543 = vst [vmem:[#allocation1] ss:$9 sm:$0xff] %v346
      %v544 = vld [vmem:[#allocation1] sm:$0xff]
      %v549 = vpack.c.bf16 %v531, %v531
      %v550 = vpack.c.bf16 %v533, %v533
      %v551 = vpack.c.bf16 %v542, %v542
      %v552 = vpack.c.bf16 %v544, %v544
      %v555 = vunpack.c.l.b16 %v549
      %v556 = vunpack.c.l.b16 %v550
      %v557 = vpack.c.b16 %v556, %v555
      %v558 = vunpack.c.l.b16 %v193
      %v559 = vunpack.c.l.b16 %v194
      %v560 = vpack.c.b16 %v559, %v558
      %v562 = vsel %vm299, %v557, 0
      %v565 = vsel %vm299, %v560, 0
      %567 = vmatpush.bf16.xpose.msra.mxu0 0
      %568 = vmatpush.bf16.xpose.msra.mxu0 0
      %569 = vmatpush.bf16.xpose.msra.mxu0 0
      %570 = vmatpush.bf16.xpose.msra.mxu0 0
      %571 = vmatpush.bf16.xpose.msra.mxu0 0
      %572 = vmatpush.bf16.xpose.msra.mxu0 0
      %573 = vmatpush.bf16.xpose.msra.mxu0 0
      %574 = vmatpush.bf16.xpose.msra.mxu0 %v565
      %575 = vmatmul.bf16.gmra.mxu0 %v562
      %v576 = vpop.f32.mrf.mxu0
      %v577 = vadd.f32 0.0, %v576
      %v578 = vpop.f32.mrf.mxu0
      %v579 = vadd.f32 0.0, %v578
      %580 = vdwg.mxu0
      %v583 = vunpack.c.l.b16 %v551
      %v584 = vunpack.c.l.b16 %v552
      %v585 = vpack.c.b16 %v584, %v583
      %v586 = vunpack.c.l.b16 %v195
      %v587 = vunpack.c.l.b16 %v196
      %v588 = vpack.c.b16 %v587, %v586
      %v590 = vsel %vm299, %v585, 0
      %v593 = vsel %vm299, %v588, 0
      %595 = vmatpush.bf16.xpose.msra.mxu0 0
      %596 = vmatpush.bf16.xpose.msra.mxu0 0
      %597 = vmatpush.bf16.xpose.msra.mxu0 0
      %598 = vmatpush.bf16.xpose.msra.mxu0 0
      %599 = vmatpush.bf16.xpose.msra.mxu0 0
      %600 = vmatpush.bf16.xpose.msra.mxu0 0
      %601 = vmatpush.bf16.xpose.msra.mxu0 0
      %602 = vmatpush.bf16.xpose.msra.mxu0 %v593
      %603 = vmatmul.bf16.gmra.mxu0 %v590
      %v604 = vpop.f32.mrf.mxu0
      %v605 = vadd.f32 0.0, %v604
      %v606 = vpop.f32.mrf.mxu0
      %v607 = vadd.f32 0.0, %v606
      %608 = vdwg.mxu0
      %v609 = vpack.c.bf16 %v577, %v577
      %v610 = vpack.c.bf16 %v579, %v579
      %v611 = vpack.c.bf16 %v605, %v605
      %v612 = vpack.c.bf16 %v607, %v607
      %613 = vst [vmem:[#allocation1] ss:$9 sm:$0xff] %v321
      %s614 = scalar_lea.vmem [#allocation1], 1
      %615 = vst [vmem:[%s614] ss:$9 sm:$0xff] %v332
      %s616 = scalar_lea.vmem [#allocation1], 2
      %617 = vst [vmem:[%s616] ss:$9 sm:$0xff] %v333
      %s618 = scalar_lea.vmem [#allocation1], 3
      %619 = vst [vmem:[%s618] ss:$9 sm:$0xff] %v334
      %s620 = scalar_lea.vmem [#allocation1], 4
      %621 = vst [vmem:[%s620] ss:$9 sm:$0xff] %v335
      %s622 = scalar_lea.vmem [#allocation1], 5
      %623 = vst [vmem:[%s622] ss:$9 sm:$0xff] %v336
      %s624 = scalar_lea.vmem [#allocation1], 6
      %625 = vst [vmem:[%s624] ss:$9 sm:$0xff] %v337
      %s626 = scalar_lea.vmem [#allocation1], 7
      %627 = vst [vmem:[%s626] ss:$9 sm:$0xff] %v338
      %v628 = vld [vmem:[#allocation1] sm:$0xff]
      %629 = vst [vmem:[#allocation1] ss:$9 sm:$0xff] %v323
      %v630 = vld [vmem:[#allocation1] sm:$0xff]
      %631 = vst [vmem:[#allocation1] ss:$9 sm:$0xff] %v339
      %632 = vst [vmem:[%s614] ss:$9 sm:$0xff] %v340
      %633 = vst [vmem:[%s616] ss:$9 sm:$0xff] %v341
      %634 = vst [vmem:[%s618] ss:$9 sm:$0xff] %v342
      %635 = vst [vmem:[%s620] ss:$9 sm:$0xff] %v343
      %636 = vst [vmem:[%s622] ss:$9 sm:$0xff] %v344
      %637 = vst [vmem:[%s624] ss:$9 sm:$0xff] %v345
      %638 = vst [vmem:[%s626] ss:$9 sm:$0xff] %v326
      %v639 = vld [vmem:[#allocation1] sm:$0xff]
      %640 = vst [vmem:[#allocation1] ss:$9 sm:$0xff] %v346
      %v641 = vld [vmem:[#allocation1] sm:$0xff]
      %v646 = vpack.c.bf16 %v628, %v628
      %v647 = vpack.c.bf16 %v630, %v630
      %v648 = vpack.c.bf16 %v639, %v639
      %v649 = vpack.c.bf16 %v641, %v641
      %v652 = vunpack.c.l.b16 %v646
      %v653 = vunpack.c.l.b16 %v647
      %v654 = vpack.c.b16 %v653, %v652
      %655 = vrot.lane.b32.xlu0 %v654, 123
      %v656 = vpop.permute.xlu0 %655
      %v658 = vsel %vm299, %v656, 0
      %660 = vmatpush.bf16.xpose.msra.mxu0 0
      %661 = vmatpush.bf16.xpose.msra.mxu0 0
      %662 = vmatpush.bf16.xpose.msra.mxu0 0
      %663 = vmatpush.bf16.xpose.msra.mxu0 0
      %664 = vmatpush.bf16.xpose.msra.mxu0 0
      %665 = vmatpush.bf16.xpose.msra.mxu0 0
      %666 = vmatpush.bf16.xpose.msra.mxu0 0
      %667 = vmatpush.bf16.xpose.msra.mxu0 %v565
      %668 = vmatmul.bf16.gmra.mxu0 %v658
      %v669 = vpop.f32.mrf.mxu0
      %v670 = vadd.f32 0.0, %v669
      %v671 = vpop.f32.mrf.mxu0
      %v672 = vadd.f32 0.0, %v671
      %673 = vdwg.mxu0
      %v676 = vunpack.c.l.b16 %v648
      %v677 = vunpack.c.l.b16 %v649
      %v678 = vpack.c.b16 %v677, %v676
      %679 = vrot.lane.b32.xlu0 %v678, 123
      %v680 = vpop.permute.xlu0 %679
      %v682 = vsel %vm299, %v680, 0
      %684 = vmatpush.bf16.xpose.msra.mxu0 0
      %685 = vmatpush.bf16.xpose.msra.mxu0 0
      %686 = vmatpush.bf16.xpose.msra.mxu0 0
      %687 = vmatpush.bf16.xpose.msra.mxu0 0
      %688 = vmatpush.bf16.xpose.msra.mxu0 0
      %689 = vmatpush.bf16.xpose.msra.mxu0 0
      %690 = vmatpush.bf16.xpose.msra.mxu0 0
      %691 = vmatpush.bf16.xpose.msra.mxu0 %v593
      %692 = vmatmul.bf16.gmra.mxu0 %v682
      %v693 = vpop.f32.mrf.mxu0
      %v694 = vadd.f32 0.0, %v693
      %v695 = vpop.f32.mrf.mxu0
      %v696 = vadd.f32 0.0, %v695
      %697 = vdwg.mxu0
      %v698 = vpack.c.bf16 %v670, %v670
      %v699 = vpack.c.bf16 %v672, %v672
      %v700 = vpack.c.bf16 %v694, %v694
      %v701 = vpack.c.bf16 %v696, %v696
      %v704 = vunpack.c.l.b16 %v698
      %v705 = vunpack.c.l.b16 %v699
      %v706 = vpack.c.b16 %v705, %v704
      %v709 = vunpack.c.l.b16 %v512
      %v710 = vunpack.c.l.b16 %v513
      %v711 = vpack.c.b16 %v710, %v709
      %712 = vrot.lane.b32.xlu0 %v711, 123
      %v713 = vpop.permute.xlu0 %712
      %vm714 = vcmask 72704
      %v716 = vsel %vm714, %v706, 0
      %vm718 = vcmask 1043456
      %vm719 = vcmask 1044480
      %v720 = vsel %vm718, 4294967295, 65535
      %v721 = vsel %vm719, %v720, 0
      %v723 = vand.u32 %v713, %v721
      %725 = vmatpush.bf16.msra.mxu0 0
      %726 = vmatpush.bf16.msra.mxu0 0
      %727 = vmatpush.bf16.msra.mxu0 0
      %728 = vmatpush.bf16.msra.mxu0 0
      %729 = vmatpush.bf16.msra.mxu0 0
      %730 = vmatpush.bf16.msra.mxu0 0
      %731 = vmatpush.bf16.msra.mxu0 0
      %732 = vmatpush.bf16.msra.mxu0 %v723
      %733 = vmatmul.bf16.gmra.mxu0 %v716
      %v734 = vpop.f32.mrf.mxu0
      %v735 = vadd.f32 0.0, %v734
      %v736 = vpop.f32.mrf.mxu0
      %v737 = vadd.f32 0.0, %v736
      %738 = vdwg.mxu0
      %v741 = vunpack.c.l.b16 %v700
      %v742 = vunpack.c.l.b16 %v701
      %v743 = vpack.c.b16 %v742, %v741
      %v746 = vunpack.c.l.b16 %v514
      %v747 = vunpack.c.l.b16 %v515
      %v748 = vpack.c.b16 %v747, %v746
      %749 = vrot.lane.b32.xlu0 %v748, 123
      %v750 = vpop.permute.xlu0 %749
      %v752 = vsel %vm714, %v743, 0
      %v755 = vand.u32 %v750, %v721
      %757 = vmatpush.bf16.msra.mxu0 0
      %758 = vmatpush.bf16.msra.mxu0 0
      %759 = vmatpush.bf16.msra.mxu0 0
      %760 = vmatpush.bf16.msra.mxu0 0
      %761 = vmatpush.bf16.msra.mxu0 0
      %762 = vmatpush.bf16.msra.mxu0 0
      %763 = vmatpush.bf16.msra.mxu0 0
      %764 = vmatpush.bf16.msra.mxu0 %v755
      %765 = vmatmul.bf16.gmra.mxu0 %v752
      %v766 = vpop.f32.mrf.mxu0
      %v767 = vadd.f32 0.0, %v766
      %v768 = vpop.f32.mrf.mxu0
      %v769 = vadd.f32 0.0, %v768
      %770 = vdwg.mxu0
      %v773 = vunpack.c.l.b16 %v609
      %v774 = vunpack.c.l.b16 %v610
      %v775 = vpack.c.b16 %v774, %v773
      %v777 = vsel %vm714, %v775, 0
      %v780 = vand.u32 %v711, %v721
      %782 = vmatpush.bf16.msra.mxu0 0
      %783 = vmatpush.bf16.msra.mxu0 0
      %784 = vmatpush.bf16.msra.mxu0 0
      %785 = vmatpush.bf16.msra.mxu0 0
      %786 = vmatpush.bf16.msra.mxu0 0
      %787 = vmatpush.bf16.msra.mxu0 0
      %788 = vmatpush.bf16.msra.mxu0 0
      %789 = vmatpush.bf16.msra.mxu0 %v780
      %790 = vmatmul.bf16.gmra.mxu0 %v777
      %v791 = vpop.f32.mrf.mxu0
      %v792 = vadd.f32 %v735, %v791
      %v793 = vpop.f32.mrf.mxu0
      %v794 = vadd.f32 %v737, %v793
      %795 = vdwg.mxu0
      %v798 = vunpack.c.l.b16 %v611
      %v799 = vunpack.c.l.b16 %v612
      %v800 = vpack.c.b16 %v799, %v798
      %v802 = vsel %vm714, %v800, 0
      %v805 = vand.u32 %v748, %v721
      %807 = vmatpush.bf16.msra.mxu0 0
      %808 = vmatpush.bf16.msra.mxu0 0
      %809 = vmatpush.bf16.msra.mxu0 0
      %810 = vmatpush.bf16.msra.mxu0 0
      %811 = vmatpush.bf16.msra.mxu0 0
      %812 = vmatpush.bf16.msra.mxu0 0
      %813 = vmatpush.bf16.msra.mxu0 0
      %814 = vmatpush.bf16.msra.mxu0 %v805
      %815 = vmatmul.bf16.gmra.mxu0 %v802
      %v816 = vpop.f32.mrf.mxu0
      %v817 = vadd.f32 %v767, %v816
      %v818 = vpop.f32.mrf.mxu0
      %v819 = vadd.f32 %v769, %v818
      %820 = vdwg.mxu0
      %v821 = vmul.f32 %v792, 0.125
      %v822 = vmul.f32 %v794, 0.125
      %v823 = vmul.f32 %v817, 0.125
      %v824 = vmul.f32 %v819, 0.125
      %v825 = vadd.f32 %v180, %v821
      %v826 = vadd.f32 %v181, %v822
      %v827 = vadd.f32 %v182, %v823
      %v828 = vadd.f32 %v183, %v824
      %v829 = vpack.c.bf16 %v825, %v825
      %v830 = vpack.c.bf16 %v826, %v826
      %v831 = vpack.c.bf16 %v827, %v827
      %v832 = vpack.c.bf16 %v828, %v828
      %s833 = scalar_lea.vmem %s1, 4
      %v834 = vld [vmem:[%s833] sm:$0x7]
      %s835 = scalar_lea.vmem %s2, 4
      %v836 = vld [vmem:[%s835] sm:$0x7]
      %v841 = vrot.slane %v829, 3
      %v842 = vrot.slane %v830, 3
      %v843 = vrot.slane %v831, 3
      %v844 = vrot.slane %v832, 3
      %v847 = vsel %vm207, %v829, %v841
      %v849 = vsel %vm212, %v829, %v841
      %v851 = vrot.slane %v849, 1
      %v852 = vsel %vm216, %v829, %v841
      %v854 = vrot.slane %v852, 2
      %v855 = vsel %vm220, %v829, %v841
      %v857 = vrot.slane %v855, 3
      %v860 = vsel %vm207, %v830, %v842
      %v864 = vsel %vm207, %v831, %v843
      %v866 = vsel %vm212, %v831, %v843
      %v868 = vrot.slane %v866, 1
      %v869 = vsel %vm216, %v831, %v843
      %v871 = vrot.slane %v869, 2
      %v872 = vsel %vm220, %v831, %v843
      %v874 = vrot.slane %v872, 3
      %v877 = vsel %vm207, %v832, %v844
      %v879 = vunpack.i.l.s16 %v847
      %v880 = vunpack.i.h.s16 %v847
      %v881 = vunpack.i.l.s16 %v851
      %v882 = vunpack.i.h.s16 %v851
      %v883 = vunpack.i.l.s16 %v854
      %v884 = vunpack.i.h.s16 %v854
      %v885 = vunpack.i.l.s16 %v857
      %v886 = vunpack.i.h.s16 %v857
      %v887 = vunpack.i.l.s16 %v860
      %v888 = vunpack.i.l.s16 %v864
      %v889 = vunpack.i.h.s16 %v864
      %v890 = vunpack.i.l.s16 %v868
      %v891 = vunpack.i.h.s16 %v868
      %v892 = vunpack.i.l.s16 %v871
      %v893 = vunpack.i.h.s16 %v871
      %v894 = vunpack.i.l.s16 %v874
      %v895 = vunpack.i.h.s16 %v874
      %v896 = vunpack.i.l.s16 %v877
      %v897 = vpack.i.b16 %v880, %v879
      %v898 = vpack.i.b16 %v882, %v881
      %v899 = vpack.i.b16 %v884, %v883
      %v900 = vpack.i.b16 %v886, %v885
      %v901 = vpack.i.b16 %v888, %v887
      %v902 = vpack.i.b16 %v890, %v889
      %v903 = vpack.i.b16 %v892, %v891
      %v904 = vpack.i.b16 %v894, %v893
      %v905 = vpack.i.b16 %v896, %v895
      %907 = vst [vmem:[#allocation1] ss:$9 sm:$0xff] %v897
      %s909 = scalar_lea.vmem [#allocation1], 1
      %910 = vst [vmem:[%s909] ss:$9 sm:$0xff] %v898
      %s912 = scalar_lea.vmem [#allocation1], 2
      %913 = vst [vmem:[%s912] ss:$9 sm:$0xff] %v899
      %s915 = scalar_lea.vmem [#allocation1], 3
      %916 = vst [vmem:[%s915] ss:$9 sm:$0xff] %v900
      %s918 = scalar_lea.vmem [#allocation1], 4
      %919 = vst [vmem:[%s918] ss:$9 sm:$0xff] %v901
      %s921 = scalar_lea.vmem [#allocation1], 5
      %922 = vst [vmem:[%s921] ss:$9 sm:$0xff] %v902
      %s924 = scalar_lea.vmem [#allocation1], 6
      %925 = vst [vmem:[%s924] ss:$9 sm:$0xff] %v903
      %s927 = scalar_lea.vmem [#allocation1], 7
      %928 = vst [vmem:[%s927] ss:$9 sm:$0xff] %v904
      %v929 = vld [vmem:[#allocation1] sm:$0xff]
      %931 = vst [vmem:[#allocation1] ss:$9 sm:$0xff] %v905
      %v932 = vld [vmem:[#allocation1] sm:$0xff]
      %v933 = vsel %vm299, %v929, 0
      %v935 = vsel %vm299, %v932, 0
      %v938 = vand.u32 %v834, %v307
      %940 = vmatpush.bf16.msra.mxu0 0
      %941 = vmatpush.bf16.msra.mxu0 0
      %942 = vmatpush.bf16.msra.mxu0 0
      %943 = vmatpush.bf16.msra.mxu0 0
      %944 = vmatpush.bf16.msra.mxu0 0
      %945 = vmatpush.bf16.msra.mxu0 0
      %946 = vmatpush.bf16.msra.mxu0 0
      %947 = vmatpush.bf16.msra.mxu0 %v938
      %948 = vmatmul.bf16.gmra.mxu0 %v933
      %v949 = vpop.f32.mrf.mxu0
      %v950 = vadd.f32 0.0, %v949
      %v951 = vpop.f32.mrf.mxu0
      %v952 = vadd.f32 0.0, %v951
      %953 = vmatmul.bf16.gmra.mxu0 %v935
      %v954 = vpop.f32.mrf.mxu0
      %v955 = vadd.f32 0.0, %v954
      %v956 = vpop.f32.mrf.mxu0
      %957 = vdwg.mxu0
      %v961 = vrot.slane %v950, 1
      %v962 = vrot.slane %v950, 2
      %v963 = vrot.slane %v950, 3
      %v964 = vrot.slane %v950, 4
      %v965 = vrot.slane %v950, 5
      %v966 = vrot.slane %v950, 6
      %v967 = vrot.slane %v950, 7
      %v968 = vrot.slane %v952, 1
      %v969 = vrot.slane %v952, 2
      %v970 = vrot.slane %v952, 3
      %v971 = vrot.slane %v952, 4
      %v972 = vrot.slane %v952, 5
      %v973 = vrot.slane %v952, 6
      %v974 = vrot.slane %v952, 7
      %v975 = vrot.slane %v955, 1
      %976 = vst [vmem:[#allocation1] ss:$9 sm:$0xff] %v897
      %s977 = scalar_lea.vmem [#allocation1], 1
      %978 = vst [vmem:[%s977] ss:$9 sm:$0xff] %v898
      %s979 = scalar_lea.vmem [#allocation1], 2
      %980 = vst [vmem:[%s979] ss:$9 sm:$0xff] %v899
      %s981 = scalar_lea.vmem [#allocation1], 3
      %982 = vst [vmem:[%s981] ss:$9 sm:$0xff] %v900
      %s983 = scalar_lea.vmem [#allocation1], 4
      %984 = vst [vmem:[%s983] ss:$9 sm:$0xff] %v901
      %s985 = scalar_lea.vmem [#allocation1], 5
      %986 = vst [vmem:[%s985] ss:$9 sm:$0xff] %v902
      %s987 = scalar_lea.vmem [#allocation1], 6
      %988 = vst [vmem:[%s987] ss:$9 sm:$0xff] %v903
      %s989 = scalar_lea.vmem [#allocation1], 7
      %990 = vst [vmem:[%s989] ss:$9 sm:$0xff] %v904
      %v991 = vld [vmem:[#allocation1] sm:$0xff]
      %992 = vst [vmem:[#allocation1] ss:$9 sm:$0xff] %v905
      %v993 = vld [vmem:[#allocation1] sm:$0xff]
      %v994 = vsel %vm299, %v991, 0
      %v996 = vsel %vm299, %v993, 0
      %v999 = vand.u32 %v836, %v307
      %1001 = vmatpush.bf16.msra.mxu0 0
      %1002 = vmatpush.bf16.msra.mxu0 0
      %1003 = vmatpush.bf16.msra.mxu0 0
      %1004 = vmatpush.bf16.msra.mxu0 0
      %1005 = vmatpush.bf16.msra.mxu0 0
      %1006 = vmatpush.bf16.msra.mxu0 0
      %1007 = vmatpush.bf16.msra.mxu0 0
      %1008 = vmatpush.bf16.msra.mxu0 %v999
      %1009 = vmatmul.bf16.gmra.mxu0 %v994
      %v1010 = vpop.f32.mrf.mxu0
      %v1011 = vadd.f32 0.0, %v1010
      %v1012 = vpop.f32.mrf.mxu0
      %v1013 = vadd.f32 0.0, %v1012
      %1014 = vmatmul.bf16.gmra.mxu0 %v996
      %v1015 = vpop.f32.mrf.mxu0
      %v1016 = vadd.f32 0.0, %v1015
      %v1017 = vpop.f32.mrf.mxu0
      %1018 = vdwg.mxu0
      %v1022 = vrot.slane %v1011, 1
      %v1023 = vrot.slane %v1011, 2
      %v1024 = vrot.slane %v1011, 3
      %v1025 = vrot.slane %v1011, 4
      %v1026 = vrot.slane %v1011, 5
      %v1027 = vrot.slane %v1011, 6
      %v1028 = vrot.slane %v1011, 7
      %v1029 = vrot.slane %v1013, 1
      %v1030 = vrot.slane %v1013, 2
      %v1031 = vrot.slane %v1013, 3
      %v1032 = vrot.slane %v1013, 4
      %v1033 = vrot.slane %v1013, 5
      %v1034 = vrot.slane %v1013, 6
      %v1035 = vrot.slane %v1013, 7
      %v1036 = vrot.slane %v1016, 1
      %v1052 = vmul.f32 %v1011, %v425
      %v1053 = vmul.f32 %v1022, %v426
      %v1054 = vmul.f32 %v1023, %v427
      %v1055 = vmul.f32 %v1024, %v428
      %v1056 = vmul.f32 %v1025, %v429
      %v1057 = vmul.f32 %v1026, %v430
      %v1058 = vmul.f32 %v1027, %v431
      %v1059 = vmul.f32 %v1028, %v432
      %v1060 = vmul.f32 %v1013, %v433
      %v1061 = vmul.f32 %v1029, %v425
      %v1062 = vmul.f32 %v1030, %v426
      %v1063 = vmul.f32 %v1031, %v427
      %v1064 = vmul.f32 %v1032, %v428
      %v1065 = vmul.f32 %v1033, %v429
      %v1066 = vmul.f32 %v1034, %v430
      %v1067 = vmul.f32 %v1035, %v431
      %v1068 = vmul.f32 %v1016, %v432
      %v1069 = vmul.f32 %v1036, %v433
      %1088 = vst [vmem:[#allocation1] ss:$9 sm:$0xff] %v1052
      %s1089 = scalar_lea.vmem [#allocation1], 1
      %1090 = vst [vmem:[%s1089] ss:$9 sm:$0xff] %v1053
      %s1091 = scalar_lea.vmem [#allocation1], 2
      %1092 = vst [vmem:[%s1091] ss:$9 sm:$0xff] %v1054
      %s1093 = scalar_lea.vmem [#allocation1], 3
      %1094 = vst [vmem:[%s1093] ss:$9 sm:$0xff] %v1055
      %s1095 = scalar_lea.vmem [#allocation1], 4
      %1096 = vst [vmem:[%s1095] ss:$9 sm:$0xff] %v1056
      %s1097 = scalar_lea.vmem [#allocation1], 5
      %1098 = vst [vmem:[%s1097] ss:$9 sm:$0xff] %v1057
      %s1099 = scalar_lea.vmem [#allocation1], 6
      %1100 = vst [vmem:[%s1099] ss:$9 sm:$0xff] %v1058
      %s1101 = scalar_lea.vmem [#allocation1], 7
      %1102 = vst [vmem:[%s1101] ss:$9 sm:$0xff] %v1059
      %v1103 = vld [vmem:[#allocation1] sm:$0xff]
      %1104 = vst [vmem:[#allocation1] ss:$9 sm:$0xff] %v1060
      %v1105 = vld [vmem:[#allocation1] sm:$0xff]
      %1106 = vst [vmem:[#allocation1] ss:$9 sm:$0xff] %v1061
      %1107 = vst [vmem:[%s1089] ss:$9 sm:$0xff] %v1062
      %1108 = vst [vmem:[%s1091] ss:$9 sm:$0xff] %v1063
      %1109 = vst [vmem:[%s1093] ss:$9 sm:$0xff] %v1064
      %1110 = vst [vmem:[%s1095] ss:$9 sm:$0xff] %v1065
      %1111 = vst [vmem:[%s1097] ss:$9 sm:$0xff] %v1066
      %1112 = vst [vmem:[%s1099] ss:$9 sm:$0xff] %v1067
      %1113 = vst [vmem:[%s1101] ss:$9 sm:$0xff] %v1068
      %v1114 = vld [vmem:[#allocation1] sm:$0xff]
      %1115 = vst [vmem:[#allocation1] ss:$9 sm:$0xff] %v1069
      %v1116 = vld [vmem:[#allocation1] sm:$0xff]
      %v1121 = vpack.c.bf16 %v1103, %v1103
      %v1122 = vpack.c.bf16 %v1105, %v1105
      %v1123 = vpack.c.bf16 %v1114, %v1114
      %v1124 = vpack.c.bf16 %v1116, %v1116
      %1125 = vst [vmem:[#allocation1] ss:$9 sm:$0xff] %v950
      %s1126 = scalar_lea.vmem [#allocation1], 1
      %1127 = vst [vmem:[%s1126] ss:$9 sm:$0xff] %v961
      %s1128 = scalar_lea.vmem [#allocation1], 2
      %1129 = vst [vmem:[%s1128] ss:$9 sm:$0xff] %v962
      %s1130 = scalar_lea.vmem [#allocation1], 3
      %1131 = vst [vmem:[%s1130] ss:$9 sm:$0xff] %v963
      %s1132 = scalar_lea.vmem [#allocation1], 4
      %1133 = vst [vmem:[%s1132] ss:$9 sm:$0xff] %v964
      %s1134 = scalar_lea.vmem [#allocation1], 5
      %1135 = vst [vmem:[%s1134] ss:$9 sm:$0xff] %v965
      %s1136 = scalar_lea.vmem [#allocation1], 6
      %1137 = vst [vmem:[%s1136] ss:$9 sm:$0xff] %v966
      %s1138 = scalar_lea.vmem [#allocation1], 7
      %1139 = vst [vmem:[%s1138] ss:$9 sm:$0xff] %v967
      %v1140 = vld [vmem:[#allocation1] sm:$0xff]
      %1141 = vst [vmem:[#allocation1] ss:$9 sm:$0xff] %v952
      %v1142 = vld [vmem:[#allocation1] sm:$0xff]
      %1143 = vst [vmem:[#allocation1] ss:$9 sm:$0xff] %v968
      %1144 = vst [vmem:[%s1126] ss:$9 sm:$0xff] %v969
      %1145 = vst [vmem:[%s1128] ss:$9 sm:$0xff] %v970
      %1146 = vst [vmem:[%s1130] ss:$9 sm:$0xff] %v971
      %1147 = vst [vmem:[%s1132] ss:$9 sm:$0xff] %v972
      %1148 = vst [vmem:[%s1134] ss:$9 sm:$0xff] %v973
      %1149 = vst [vmem:[%s1136] ss:$9 sm:$0xff] %v974
      %1150 = vst [vmem:[%s1138] ss:$9 sm:$0xff] %v955
      %v1151 = vld [vmem:[#allocation1] sm:$0xff]
      %1152 = vst [vmem:[#allocation1] ss:$9 sm:$0xff] %v975
      %v1153 = vld [vmem:[#allocation1] sm:$0xff]
      %v1158 = vpack.c.bf16 %v1140, %v1140
      %v1159 = vpack.c.bf16 %v1142, %v1142
      %v1160 = vpack.c.bf16 %v1151, %v1151
      %v1161 = vpack.c.bf16 %v1153, %v1153
      %v1164 = vunpack.c.l.b16 %v1158
      %v1165 = vunpack.c.l.b16 %v1159
      %v1166 = vpack.c.b16 %v1165, %v1164
      %v1167 = vunpack.c.l.b16 %v829
      %v1168 = vunpack.c.l.b16 %v830
      %v1169 = vpack.c.b16 %v1168, %v1167
      %v1171 = vsel %vm299, %v1166, 0
      %v1174 = vsel %vm299, %v1169, 0
      %1176 = vmatpush.bf16.xpose.msra.mxu0 0
      %1177 = vmatpush.bf16.xpose.msra.mxu0 0
      %1178 = vmatpush.bf16.xpose.msra.mxu0 0
      %1179 = vmatpush.bf16.xpose.msra.mxu0 0
      %1180 = vmatpush.bf16.xpose.msra.mxu0 0
      %1181 = vmatpush.bf16.xpose.msra.mxu0 0
      %1182 = vmatpush.bf16.xpose.msra.mxu0 0
      %1183 = vmatpush.bf16.xpose.msra.mxu0 %v1174
      %1184 = vmatmul.bf16.gmra.mxu0 %v1171
      %v1185 = vpop.f32.mrf.mxu0
      %v1186 = vadd.f32 0.0, %v1185
      %v1187 = vpop.f32.mrf.mxu0
      %v1188 = vadd.f32 0.0, %v1187
      %1189 = vdwg.mxu0
      %v1192 = vunpack.c.l.b16 %v1160
      %v1193 = vunpack.c.l.b16 %v1161
      %v1194 = vpack.c.b16 %v1193, %v1192
      %v1195 = vunpack.c.l.b16 %v831
      %v1196 = vunpack.c.l.b16 %v832
      %v1197 = vpack.c.b16 %v1196, %v1195
      %v1199 = vsel %vm299, %v1194, 0
      %v1202 = vsel %vm299, %v1197, 0
      %1204 = vmatpush.bf16.xpose.msra.mxu0 0
      %1205 = vmatpush.bf16.xpose.msra.mxu0 0
      %1206 = vmatpush.bf16.xpose.msra.mxu0 0
      %1207 = vmatpush.bf16.xpose.msra.mxu0 0
      %1208 = vmatpush.bf16.xpose.msra.mxu0 0
      %1209 = vmatpush.bf16.xpose.msra.mxu0 0
      %1210 = vmatpush.bf16.xpose.msra.mxu0 0
      %1211 = vmatpush.bf16.xpose.msra.mxu0 %v1202
      %1212 = vmatmul.bf16.gmra.mxu0 %v1199
      %v1213 = vpop.f32.mrf.mxu0
      %v1214 = vadd.f32 0.0, %v1213
      %v1215 = vpop.f32.mrf.mxu0
      %v1216 = vadd.f32 0.0, %v1215
      %1217 = vdwg.mxu0
      %v1218 = vpack.c.bf16 %v1186, %v1186
      %v1219 = vpack.c.bf16 %v1188, %v1188
      %v1220 = vpack.c.bf16 %v1214, %v1214
      %v1221 = vpack.c.bf16 %v1216, %v1216
      %1222 = vst [vmem:[#allocation1] ss:$9 sm:$0xff] %v950
      %s1223 = scalar_lea.vmem [#allocation1], 1
      %1224 = vst [vmem:[%s1223] ss:$9 sm:$0xff] %v961
      %s1225 = scalar_lea.vmem [#allocation1], 2
      %1226 = vst [vmem:[%s1225] ss:$9 sm:$0xff] %v962
      %s1227 = scalar_lea.vmem [#allocation1], 3
      %1228 = vst [vmem:[%s1227] ss:$9 sm:$0xff] %v963
      %s1229 = scalar_lea.vmem [#allocation1], 4
      %1230 = vst [vmem:[%s1229] ss:$9 sm:$0xff] %v964
      %s1231 = scalar_lea.vmem [#allocation1], 5
      %1232 = vst [vmem:[%s1231] ss:$9 sm:$0xff] %v965
      %s1233 = scalar_lea.vmem [#allocation1], 6
      %1234 = vst [vmem:[%s1233] ss:$9 sm:$0xff] %v966
      %s1235 = scalar_lea.vmem [#allocation1], 7
      %1236 = vst [vmem:[%s1235] ss:$9 sm:$0xff] %v967
      %v1237 = vld [vmem:[#allocation1] sm:$0xff]
      %1238 = vst [vmem:[#allocation1] ss:$9 sm:$0xff] %v952
      %v1239 = vld [vmem:[#allocation1] sm:$0xff]
      %1240 = vst [vmem:[#allocation1] ss:$9 sm:$0xff] %v968
      %1241 = vst [vmem:[%s1223] ss:$9 sm:$0xff] %v969
      %1242 = vst [vmem:[%s1225] ss:$9 sm:$0xff] %v970
      %1243 = vst [vmem:[%s1227] ss:$9 sm:$0xff] %v971
      %1244 = vst [vmem:[%s1229] ss:$9 sm:$0xff] %v972
      %1245 = vst [vmem:[%s1231] ss:$9 sm:$0xff] %v973
      %1246 = vst [vmem:[%s1233] ss:$9 sm:$0xff] %v974
      %1247 = vst [vmem:[%s1235] ss:$9 sm:$0xff] %v955
      %v1248 = vld [vmem:[#allocation1] sm:$0xff]
      %1249 = vst [vmem:[#allocation1] ss:$9 sm:$0xff] %v975
      %v1250 = vld [vmem:[#allocation1] sm:$0xff]
      %v1255 = vpack.c.bf16 %v1237, %v1237
      %v1256 = vpack.c.bf16 %v1239, %v1239
      %v1257 = vpack.c.bf16 %v1248, %v1248
      %v1258 = vpack.c.bf16 %v1250, %v1250
      %v1261 = vunpack.c.l.b16 %v1255
      %v1262 = vunpack.c.l.b16 %v1256
      %v1263 = vpack.c.b16 %v1262, %v1261
      %1264 = vrot.lane.b32.xlu0 %v1263, 123
      %v1265 = vpop.permute.xlu0 %1264
      %v1267 = vsel %vm299, %v1265, 0
      %1269 = vmatpush.bf16.xpose.msra.mxu0 0
      %1270 = vmatpush.bf16.xpose.msra.mxu0 0
      %1271 = vmatpush.bf16.xpose.msra.mxu0 0
      %1272 = vmatpush.bf16.xpose.msra.mxu0 0
      %1273 = vmatpush.bf16.xpose.msra.mxu0 0
      %1274 = vmatpush.bf16.xpose.msra.mxu0 0
      %1275 = vmatpush.bf16.xpose.msra.mxu0 0
      %1276 = vmatpush.bf16.xpose.msra.mxu0 %v1174
      %1277 = vmatmul.bf16.gmra.mxu0 %v1267
      %v1278 = vpop.f32.mrf.mxu0
      %v1279 = vadd.f32 0.0, %v1278
      %v1280 = vpop.f32.mrf.mxu0
      %v1281 = vadd.f32 0.0, %v1280
      %1282 = vdwg.mxu0
      %v1285 = vunpack.c.l.b16 %v1257
      %v1286 = vunpack.c.l.b16 %v1258
      %v1287 = vpack.c.b16 %v1286, %v1285
      %1288 = vrot.lane.b32.xlu0 %v1287, 123
      %v1289 = vpop.permute.xlu0 %1288
      %v1291 = vsel %vm299, %v1289, 0
      %1293 = vmatpush.bf16.xpose.msra.mxu0 0
      %1294 = vmatpush.bf16.xpose.msra.mxu0 0
      %1295 = vmatpush.bf16.xpose.msra.mxu0 0
      %1296 = vmatpush.bf16.xpose.msra.mxu0 0
      %1297 = vmatpush.bf16.xpose.msra.mxu0 0
      %1298 = vmatpush.bf16.xpose.msra.mxu0 0
      %1299 = vmatpush.bf16.xpose.msra.mxu0 0
      %1300 = vmatpush.bf16.xpose.msra.mxu0 %v1202
      %1301 = vmatmul.bf16.gmra.mxu0 %v1291
      %v1302 = vpop.f32.mrf.mxu0
      %v1303 = vadd.f32 0.0, %v1302
      %v1304 = vpop.f32.mrf.mxu0
      %v1305 = vadd.f32 0.0, %v1304
      %1306 = vdwg.mxu0
      %v1307 = vpack.c.bf16 %v1279, %v1279
      %v1308 = vpack.c.bf16 %v1281, %v1281
      %v1309 = vpack.c.bf16 %v1303, %v1303
      %v1310 = vpack.c.bf16 %v1305, %v1305
      %v1313 = vunpack.c.l.b16 %v1307
      %v1314 = vunpack.c.l.b16 %v1308
      %v1315 = vpack.c.b16 %v1314, %v1313
      %v1318 = vunpack.c.l.b16 %v1121
      %v1319 = vunpack.c.l.b16 %v1122
      %v1320 = vpack.c.b16 %v1319, %v1318
      %1321 = vrot.lane.b32.xlu0 %v1320, 123
      %v1322 = vpop.permute.xlu0 %1321
      %v1324 = vsel %vm714, %v1315, 0
      %v1327 = vand.u32 %v1322, %v721
      %1329 = vmatpush.bf16.msra.mxu0 0
      %1330 = vmatpush.bf16.msra.mxu0 0
      %1331 = vmatpush.bf16.msra.mxu0 0
      %1332 = vmatpush.bf16.msra.mxu0 0
      %1333 = vmatpush.bf16.msra.mxu0 0
      %1334 = vmatpush.bf16.msra.mxu0 0
      %1335 = vmatpush.bf16.msra.mxu0 0
      %1336 = vmatpush.bf16.msra.mxu0 %v1327
      %1337 = vmatmul.bf16.gmra.mxu0 %v1324
      %v1338 = vpop.f32.mrf.mxu0
      %v1339 = vadd.f32 0.0, %v1338
      %v1340 = vpop.f32.mrf.mxu0
      %v1341 = vadd.f32 0.0, %v1340
      %1342 = vdwg.mxu0
      %v1345 = vunpack.c.l.b16 %v1309
      %v1346 = vunpack.c.l.b16 %v1310
      %v1347 = vpack.c.b16 %v1346, %v1345
      %v1350 = vunpack.c.l.b16 %v1123
      %v1351 = vunpack.c.l.b16 %v1124
      %v1352 = vpack.c.b16 %v1351, %v1350
      %1353 = vrot.lane.b32.xlu0 %v1352, 123
      %v1354 = vpop.permute.xlu0 %1353
      %v1356 = vsel %vm714, %v1347, 0
      %v1359 = vand.u32 %v1354, %v721
      %1361 = vmatpush.bf16.msra.mxu0 0
      %1362 = vmatpush.bf16.msra.mxu0 0
      %1363 = vmatpush.bf16.msra.mxu0 0
      %1364 = vmatpush.bf16.msra.mxu0 0
      %1365 = vmatpush.bf16.msra.mxu0 0
      %1366 = vmatpush.bf16.msra.mxu0 0
      %1367 = vmatpush.bf16.msra.mxu0 0
      %1368 = vmatpush.bf16.msra.mxu0 %v1359
      %1369 = vmatmul.bf16.gmra.mxu0 %v1356
      %v1370 = vpop.f32.mrf.mxu0
      %v1371 = vadd.f32 0.0, %v1370
      %v1372 = vpop.f32.mrf.mxu0
      %v1373 = vadd.f32 0.0, %v1372
      %1374 = vdwg.mxu0
      %v1377 = vunpack.c.l.b16 %v1218
      %v1378 = vunpack.c.l.b16 %v1219
      %v1379 = vpack.c.b16 %v1378, %v1377
      %v1381 = vsel %vm714, %v1379, 0
      %v1384 = vand.u32 %v1320, %v721
      %1386 = vmatpush.bf16.msra.mxu0 0
      %1387 = vmatpush.bf16.msra.mxu0 0
      %1388 = vmatpush.bf16.msra.mxu0 0
      %1389 = vmatpush.bf16.msra.mxu0 0
      %1390 = vmatpush.bf16.msra.mxu0 0
      %1391 = vmatpush.bf16.msra.mxu0 0
      %1392 = vmatpush.bf16.msra.mxu0 0
      %1393 = vmatpush.bf16.msra.mxu0 %v1384
      %1394 = vmatmul.bf16.gmra.mxu0 %v1381
      %v1395 = vpop.f32.mrf.mxu0
      %v1396 = vadd.f32 %v1339, %v1395
      %v1397 = vpop.f32.mrf.mxu0
      %v1398 = vadd.f32 %v1341, %v1397
      %1399 = vdwg.mxu0
      %v1402 = vunpack.c.l.b16 %v1220
      %v1403 = vunpack.c.l.b16 %v1221
      %v1404 = vpack.c.b16 %v1403, %v1402
      %v1406 = vsel %vm714, %v1404, 0
      %v1409 = vand.u32 %v1352, %v721
      %1411 = vmatpush.bf16.msra.mxu0 0
      %1412 = vmatpush.bf16.msra.mxu0 0
      %1413 = vmatpush.bf16.msra.mxu0 0
      %1414 = vmatpush.bf16.msra.mxu0 0
      %1415 = vmatpush.bf16.msra.mxu0 0
      %1416 = vmatpush.bf16.msra.mxu0 0
      %1417 = vmatpush.bf16.msra.mxu0 0
      %1418 = vmatpush.bf16.msra.mxu0 %v1409
      %1419 = vmatmul.bf16.gmra.mxu0 %v1406
      %v1420 = vpop.f32.mrf.mxu0
      %v1421 = vadd.f32 %v1371, %v1420
      %v1422 = vpop.f32.mrf.mxu0
      %v1423 = vadd.f32 %v1373, %v1422
      %1424 = vdwg.mxu0
      %v1425 = vmul.f32 %v1396, 0.125
      %v1426 = vmul.f32 %v1398, 0.125
      %v1427 = vmul.f32 %v1421, 0.125
      %v1428 = vmul.f32 %v1423, 0.125
      %v1429 = vadd.f32 %v825, %v1425
      %v1430 = vadd.f32 %v826, %v1426
      %v1431 = vadd.f32 %v827, %v1427
      %v1432 = vadd.f32 %v828, %v1428
      %1433 = vst.msk [vmem:[%s177] sm:$0xff] %vm299, %v1429
      %vm1434 = vcmask 32768
      %1435 = vst.msk [vmem:[%s177 + $0x8] sm:$0x1] %vm1434, %v1430
      %1436 = vst.msk [vmem:[%s177 + $0x10] sm:$0xff] %vm299, %v1431
      %1437 = vst.msk [vmem:[%s177 + $0x18] sm:$0x1] %vm1434, %v1432
      %s1438 = smul.u32 2, %s14
      %p1439 = scmp.lt.s32.totalorder %s1438, 3
      %s1440 = scalar_select %p1439, %s1438, 3
      %s1441 = smul.addr %s1440, 2
      %s1442 = smul.addr %s1441, 8
      %s1443 = scalar_lea.vmem %s3, %s1442
      // Predicated region
      $region33: #{tpu_custom_call.1} parent=31 // pred_check
        %p1444 = pneg %p100
      $region34: #{tpu_custom_call.1} parent=31 // pred_check_branch
        %1446 = sbr.rel (%p1444) target = $region36
      $region35: #{tpu_custom_call.1} parent=31 // pred_region
        %s1447 = smul.u32 2, %s14
      $region36: #{tpu_custom_call.1} parent=31 // pred_fallthru
        _
    $region32: #{tpu_custom_call.1} parent=5 // pred_fallthru
      _
    %p1448 = scmp.le.s32.totalorder 2, %s9
    // Predicated region
    $region37: #{tpu_custom_call.1} parent=5 // pred_check
      %p1449 = pneg %p1448
    $region38: #{tpu_custom_call.1} parent=5 // pred_check_branch
      %1451 = sbr.rel (%p1449) target = $region40
    $region39: #{tpu_custom_call.1} parent=5 // pred_region
      %s1452 = ssub.s32 %s9, 2
      // Predicated region
      $region41: #{tpu_custom_call.1} parent=39 // pred_check
        %p1453 = pneg %p106
      $region42: #{tpu_custom_call.1} parent=39 // pred_check_branch
        %1455 = sbr.rel (%p1453) target = $region44
      $region43: #{tpu_custom_call.1} parent=39 // pred_region
        %s1456 = smul.u32 2, %s15
        %p1457 = scmp.lt.s32.totalorder %s1456, 3
        %s1458 = scalar_select %p1457, %s1456, 3
        %s1459 = smul.addr %s1458, 2
        %s1460 = smul.addr %s1459, 8
        %s1461 = scalar_lea.vmem %s3, %s1460
      $region44: #{tpu_custom_call.1} parent=39 // pred_fallthru
        _
    $region40: #{tpu_custom_call.1} parent=5 // pred_fallthru
      _
  $region6: #{tpu_custom_call.1} parent=0 // loop_footer
    %s13 = sadd.s32 1, %s9
  $region7: #{tpu_custom_call.1} parent=0 // loop_footer_branch
    %8 = sbr.rel target = $region3
  $region8: #{tpu_custom_call.1} parent=0 // loop_exit
    _

</llo_original>
